<compile_context>
chip_gen: v6e
topology: v6e:2x2x1
jax: 0.10.0
libtpu: 0.0.40
codegen_flags: <defaults>
</compile_context>

<pallas_src>
import numpy as np
import jax
import jax.numpy as jnp
from jax import lax
from jax.experimental import pallas as pl
from jax.experimental.pallas import tpu as pltpu

K = 7
PAD = K // 2        # 3
N_KY = PAD + 1      # 4 live kernel rows under the type-B mask


# ----------------------------- weight packing -----------------------------

def _type_b_mask(cout, cin):
    m = np.zeros((cout, cin, K, K), np.float32)
    m[:, :, :PAD, :] = 1.0
    m[:, :, PAD, :PAD] = 1.0
    m[:, :, PAD, PAD] = 1.0
    return m


def _pack_block_diag(w_io, W):
    # 1x1 conv (cin -> cout) as a (W*cin, W*cout) block-diagonal matrix acting
    # on lane-collapsed rows laid out as [w*cin + ci].
    cin, cout = w_io.shape
    big = np.zeros((W * cin, W * cout), np.float32)
    for w in range(W):
        big[w * cin:(w + 1) * cin, w * cout:(w + 1) * cout] = w_io
    return big


def _pack_toeplitz_stacked(w2_masked_oihw, W):
    # Masked 7x7 conv: per live kernel row ky a block-Toeplitz matrix T[ky] of
    # shape (W*cin, W*cout) such that
    #   out_row[h] = sum_ky padded_hidden_row[h + ky] @ T[ky]
    # with the kx taps, horizontal zero padding and the type-B mask baked in.
    # The 4 ky blocks are stacked along K so the whole conv is ONE matmul with
    # K = N_KY * W * cin (= 256 here).
    cout, cin, _, _ = w2_masked_oihw.shape
    T = np.zeros((N_KY, W * cin, W * cout), np.float32)
    for ky in range(N_KY):
        for kx in range(K):
            w_io = np.transpose(w2_masked_oihw[:, :, ky, kx], (1, 0))  # (ci, co)
            for w in range(W):
                j = w + kx - PAD
                if 0 <= j < W:
                    T[ky, j * cin:(j + 1) * cin, w * cout:(w + 1) * cout] = w_io
    return T.reshape(N_KY * W * cin, W * cout)


# ------------------------------ pallas kernel ------------------------------

def resblock_pallas(x_nhwc, w1_big, b1t, w2_stk, b2t, w3_big, b3t):
    B, H, W, C = x_nhwc.shape
    Lin = W * C                    # lane width for input / output / residual
    Lmid = w1_big.shape[1]         # W * Cmid

    # Wrapper-side layout plumbing: lane-collapsed (B, H, W*C) slabs.
    x3d = x_nhwc.reshape(B, H, Lin)

    def kernel(x_ref, w1_ref, b1_ref, w2_ref, b2_ref, w3_ref, b3_ref, out_ref):
        x = x_ref[0]                                             # (H, Lin) f32

        # ReLU -> 1x1 conv (block-diag matmul, bf16 MXU, f32 acc) -> bias -> ReLU
        h1 = jnp.dot(jnp.maximum(x, 0.0).astype(jnp.bfloat16), w1_ref[...],
                     preferred_element_type=jnp.float32)
        h1 = jnp.maximum(h1 + b1_ref[...], 0.0)                  # (H, Lmid) f32

        # Masked 7x7 conv as a single K = N_KY*Lmid matmul: lane-concat the 4
        # vertically shifted hidden views (top halo zero-padded; the bottom
        # halo is dead under the type-B mask and never materialized).
        p = jnp.concatenate(
            [jnp.zeros((PAD, Lmid), jnp.float32), h1], axis=0)   # (H+PAD, Lmid)
        o = jnp.concatenate([p[ky:ky + H, :] for ky in range(N_KY)],
                            axis=1)                              # (H, N_KY*Lmid)
        h2 = jnp.dot(o.astype(jnp.bfloat16), w2_ref[...],
                     preferred_element_type=jnp.float32)
        h2 = jnp.maximum(h2 + b2_ref[...], 0.0)                  # (H, Lmid) f32

        # 1x1 conv (block-diag) -> bias -> residual add. Lane-dense (128) store.
        h3 = jnp.dot(h2.astype(jnp.bfloat16), w3_ref[...],
                     preferred_element_type=jnp.float32) + b3_ref[...]
        out_ref[0] = (h3 + x).astype(out_ref.dtype)

    out3d = pl.pallas_call(
        kernel,
        out_shape=jax.ShapeDtypeStruct((B, H, Lin), jnp.float32),
        grid_spec=pltpu.PrefetchScalarGridSpec(
            num_scalar_prefetch=0,
            grid=(B,),
            in_specs=[
                pl.BlockSpec((1, H, Lin), lambda b: (b, 0, 0)),
                # Constant index_maps: weights/biases DMA'd once, stay resident.
                pl.BlockSpec(w1_big.shape, lambda b: (0, 0)),
                pl.BlockSpec(b1t.shape, lambda b: (0, 0)),
                pl.BlockSpec(w2_stk.shape, lambda b: (0, 0)),
                pl.BlockSpec(b2t.shape, lambda b: (0, 0)),
                pl.BlockSpec(w3_big.shape, lambda b: (0, 0)),
                pl.BlockSpec(b3t.shape, lambda b: (0, 0)),
            ],
            out_specs=pl.BlockSpec((1, H, Lin), lambda b: (b, 0, 0)),
        ),
        compiler_params=pltpu.CompilerParams(
            dimension_semantics=("parallel",)),
    )(x3d, w1_big, b1t, w2_stk, b2t, w3_big, b3t)

    return out3d.reshape(B, H, W, C)


# ------------------------------- reference ---------------------------------

def _conv_nhwc(x, w_oihw, b, pad):
    w_hwio = jnp.transpose(w_oihw, (2, 3, 1, 0))
    y = lax.conv_general_dilated(
        x, w_hwio, window_strides=(1, 1),
        padding=[(pad, pad), (pad, pad)],
        dimension_numbers=('NHWC', 'HWIO', 'NHWC'))
    return y + b.reshape(1, 1, 1, -1)


def resblock_reference(x_nhwc, w1_oihw, b1, w2_oihw, b2, w3_oihw, b3, mask):
    h = jax.nn.relu(x_nhwc)
    h = _conv_nhwc(h, w1_oihw, b1, pad=0)
    h = jax.nn.relu(h)
    h = _conv_nhwc(h, w2_oihw * mask, b2, pad=PAD)
    h = jax.nn.relu(h)
    h = _conv_nhwc(h, w3_oihw, b3, pad=0)
    return h + x_nhwc


if __name__ == "__main__":
    B, C, H, W = 2, 8, 16, 16
    Cmid = C // 2

    key = jax.random.PRNGKey(0)
    k = jax.random.split(key, 7)

    # Deterministic parameter init (PyTorch OIHW weight layout).
    w1_oihw = 0.1 * jax.random.normal(k[0], (Cmid, C, 1, 1), jnp.float32)
    b1 = 0.1 * jax.random.normal(k[1], (Cmid,), jnp.float32)
    w2_oihw = 0.1 * jax.random.normal(k[2], (Cmid, Cmid, K, K), jnp.float32)
    b2 = 0.1 * jax.random.normal(k[3], (Cmid,), jnp.float32)
    w3_oihw = 0.1 * jax.random.normal(k[4], (C, Cmid, 1, 1), jnp.float32)
    b3 = 0.1 * jax.random.normal(k[5], (C,), jnp.float32)

    # Type-'B' mask (MaskConv2d.create_mask, no color conditioning).
    mask_np = _type_b_mask(Cmid, Cmid)
    mask = jnp.asarray(mask_np)

    # Input in PyTorch NCHW, transposed to NHWC for the kernel.
    x_nchw = jax.random.normal(k[6], (B, C, H, W), jnp.float32)
    x_nhwc = jnp.transpose(x_nchw, (0, 2, 3, 1))

    # Pack weights for the lane-collapsed kernel layout (wrapper-side, once).
    # MXU operands are bf16; biases stay f32 (added after f32 accumulation).
    w1_io = np.asarray(w1_oihw)[:, :, 0, 0].T                 # (C, Cmid)
    w3_io = np.asarray(w3_oihw)[:, :, 0, 0].T                 # (Cmid, C)
    w2_masked = np.asarray(w2_oihw) * mask_np                 # type-B mask baked in

    w1_big = jnp.asarray(_pack_block_diag(w1_io, W), dtype=jnp.bfloat16)   # (W*C,      W*Cmid)
    w3_big = jnp.asarray(_pack_block_diag(w3_io, W), dtype=jnp.bfloat16)   # (W*Cmid,   W*C)
    w2_stk = jnp.asarray(_pack_toeplitz_stacked(w2_masked, W),
                         dtype=jnp.bfloat16)                               # (4*W*Cmid, W*Cmid)

    b1t = jnp.asarray(np.tile(np.asarray(b1), W).reshape(1, W * Cmid))
    b2t = jnp.asarray(np.tile(np.asarray(b2), W).reshape(1, W * Cmid))
    b3t = jnp.asarray(np.tile(np.asarray(b3), W).reshape(1, W * C))

    out = resblock_pallas(x_nhwc, w1_big, b1t, w2_stk, b2t, w3_big, b3t)
    out = jax.block_until_ready(out)

    ref = resblock_reference(x_nhwc, w1_oihw, b1, w2_oihw, b2, w3_oihw, b3, mask)
    ref = jax.block_until_ready(ref)

    # bf16 MXU inputs with f32 accumulation -> bf16-level tolerance.
    np.testing.assert_allclose(np.asarray(out), np.asarray(ref),
                               rtol=2e-2, atol=2e-2)
    print("KERNEL_OK")
</pallas_src>

<mosaic_0001>
module attributes {stable_mosaic.version = 11 : i64} {
  func.func @kernel(%arg0: i32, %arg1: memref<1x16x128xf32, #tpu.memory_space<vmem>>, %arg2: memref<128x64xbf16, #tpu.memory_space<vmem>>, %arg3: memref<1x64xf32, #tpu.memory_space<vmem>>, %arg4: memref<256x64xbf16, #tpu.memory_space<vmem>>, %arg5: memref<1x64xf32, #tpu.memory_space<vmem>>, %arg6: memref<64x128xbf16, #tpu.memory_space<vmem>>, %arg7: memref<1x128xf32, #tpu.memory_space<vmem>>, %arg8: memref<1x16x128xf32, #tpu.memory_space<vmem>>) attributes {dimension_semantics = [#tpu.dimension_semantics<parallel>], iteration_bounds = array<i64: 2>, scalar_prefetch = 0 : i64, scratch_operands = 0 : i64, tpu.core_type = #tpu.core_type<tc>, window_params = [{transform_indices = @transform_0, window_bounds = array<i64: 1, 16, 128>}, {pipeline_mode = #tpu.pipeline_mode<synchronous>, transform_indices = @transform_1, window_bounds = array<i64: 128, 64>}, {pipeline_mode = #tpu.pipeline_mode<synchronous>, transform_indices = @transform_2, window_bounds = array<i64: 1, 64>}, {pipeline_mode = #tpu.pipeline_mode<synchronous>, transform_indices = @transform_3, window_bounds = array<i64: 256, 64>}, {pipeline_mode = #tpu.pipeline_mode<synchronous>, transform_indices = @transform_4, window_bounds = array<i64: 1, 64>}, {pipeline_mode = #tpu.pipeline_mode<synchronous>, transform_indices = @transform_5, window_bounds = array<i64: 64, 128>}, {pipeline_mode = #tpu.pipeline_mode<synchronous>, transform_indices = @transform_6, window_bounds = array<i64: 1, 128>}, {transform_indices = @transform_7, window_bounds = array<i64: 1, 16, 128>}]} {
    %c0 = arith.constant 0 : index
    %c0_0 = arith.constant 0 : index
    %c0_1 = arith.constant 0 : index
    %0 = vector.load %arg1[%c0, %c0_0, %c0_1] : memref<1x16x128xf32, #tpu.memory_space<vmem>>, vector<1x16x128xf32>
    %1 = vector.shape_cast %0 : vector<1x16x128xf32> to vector<16x128xf32>
    %cst = arith.constant 0.000000e+00 : f32
    %2 = vector.broadcast %cst : f32 to vector<16x128xf32>
    %3 = arith.maximumf %1, %2 : vector<16x128xf32>
    %4 = arith.truncf %3 : vector<16x128xf32> to vector<16x128xbf16>
    %c0_2 = arith.constant 0 : index
    %c0_3 = arith.constant 0 : index
    %5 = vector.load %arg2[%c0_2, %c0_3] : memref<128x64xbf16, #tpu.memory_space<vmem>>, vector<128x64xbf16>
    %cst_4 = arith.constant dense<0.000000e+00> : vector<16x64xf32>
    %6 = tpu.matmul %4, %5, %cst_4 {dimension_numbers = #tpu.dot_dimension_numbers<[1], [0], [0], [1], [0, 0, 1, 1], [], []>} : vector<16x128xbf16>, vector<128x64xbf16>, vector<16x64xf32> -> vector<16x64xf32>
    %c0_5 = arith.constant 0 : index
    %c0_6 = arith.constant 0 : index
    %7 = vector.load %arg3[%c0_5, %c0_6] : memref<1x64xf32, #tpu.memory_space<vmem>>, vector<1x64xf32>
    %8 = vector.broadcast %7 : vector<1x64xf32> to vector<16x64xf32>
    %9 = arith.addf %6, %8 : vector<16x64xf32>
    %cst_7 = arith.constant 0.000000e+00 : f32
    %10 = vector.broadcast %cst_7 : f32 to vector<16x64xf32>
    %11 = arith.maximumf %9, %10 : vector<16x64xf32>
    %cst_8 = arith.constant 0.000000e+00 : f32
    %12 = vector.broadcast %cst_8 : f32 to vector<3x64xf32>
    %13 = tpu.concatenate %12, %11 in 0 : vector<3x64xf32>, vector<16x64xf32> -> vector<19x64xf32>
    %14 = vector.extract_strided_slice %13 {offsets = [0, 0], sizes = [16, 64], strides = [1, 1]} : vector<19x64xf32> to vector<16x64xf32>
    %15 = vector.extract_strided_slice %13 {offsets = [1, 0], sizes = [16, 64], strides = [1, 1]} : vector<19x64xf32> to vector<16x64xf32>
    %16 = vector.extract_strided_slice %13 {offsets = [2, 0], sizes = [16, 64], strides = [1, 1]} : vector<19x64xf32> to vector<16x64xf32>
    %17 = vector.extract_strided_slice %13 {offsets = [3, 0], sizes = [16, 64], strides = [1, 1]} : vector<19x64xf32> to vector<16x64xf32>
    %18 = tpu.concatenate %14, %15, %16, %17 in 1 : vector<16x64xf32>, vector<16x64xf32>, vector<16x64xf32>, vector<16x64xf32> -> vector<16x256xf32>
    %19 = arith.truncf %18 : vector<16x256xf32> to vector<16x256xbf16>
    %c0_9 = arith.constant 0 : index
    %c0_10 = arith.constant 0 : index
    %20 = vector.load %arg4[%c0_9, %c0_10] : memref<256x64xbf16, #tpu.memory_space<vmem>>, vector<256x64xbf16>
    %cst_11 = arith.constant dense<0.000000e+00> : vector<16x64xf32>
    %21 = tpu.matmul %19, %20, %cst_11 {dimension_numbers = #tpu.dot_dimension_numbers<[1], [0], [0], [1], [0, 0, 1, 1], [], []>} : vector<16x256xbf16>, vector<256x64xbf16>, vector<16x64xf32> -> vector<16x64xf32>
    %c0_12 = arith.constant 0 : index
    %c0_13 = arith.constant 0 : index
    %22 = vector.load %arg5[%c0_12, %c0_13] : memref<1x64xf32, #tpu.memory_space<vmem>>, vector<1x64xf32>
    %23 = vector.broadcast %22 : vector<1x64xf32> to vector<16x64xf32>
    %24 = arith.addf %21, %23 : vector<16x64xf32>
    %cst_14 = arith.constant 0.000000e+00 : f32
    %25 = vector.broadcast %cst_14 : f32 to vector<16x64xf32>
    %26 = arith.maximumf %24, %25 : vector<16x64xf32>
    %27 = arith.truncf %26 : vector<16x64xf32> to vector<16x64xbf16>
    %c0_15 = arith.constant 0 : index
    %c0_16 = arith.constant 0 : index
    %28 = vector.load %arg6[%c0_15, %c0_16] : memref<64x128xbf16, #tpu.memory_space<vmem>>, vector<64x128xbf16>
    %cst_17 = arith.constant dense<0.000000e+00> : vector<16x128xf32>
    %29 = tpu.matmul %27, %28, %cst_17 {dimension_numbers = #tpu.dot_dimension_numbers<[1], [0], [0], [1], [0, 0, 1, 1], [], []>} : vector<16x64xbf16>, vector<64x128xbf16>, vector<16x128xf32> -> vector<16x128xf32>
    %c0_18 = arith.constant 0 : index
    %c0_19 = arith.constant 0 : index
    %30 = vector.load %arg7[%c0_18, %c0_19] : memref<1x128xf32, #tpu.memory_space<vmem>>, vector<1x128xf32>
    %31 = vector.broadcast %30 : vector<1x128xf32> to vector<16x128xf32>
    %32 = arith.addf %29, %31 : vector<16x128xf32>
    %33 = arith.addf %32, %1 : vector<16x128xf32>
    %c0_20 = arith.constant 0 : index
    %c0_21 = arith.constant 0 : index
    %c0_22 = arith.constant 0 : index
    %34 = vector.load %arg8[%c0_20, %c0_21, %c0_22] : memref<1x16x128xf32, #tpu.memory_space<vmem>>, vector<1x16x128xf32>
    %35 = vector.shape_cast %34 : vector<1x16x128xf32> to vector<16x128xf32>
    %36 = vector.shape_cast %33 : vector<16x128xf32> to vector<1x16x128xf32>
    tpu.vector_store %arg8[%c0_20, %c0_21, %c0_22], %36 {strides = array<i32>} : memref<1x16x128xf32, #tpu.memory_space<vmem>>, vector<1x16x128xf32>,
    return
  }
  func.func @transform_0(%arg0: i32) -> (i32, i32, i32) {
    %c0_i32 = arith.constant 0 : i32
    %c0_i32_0 = arith.constant 0 : i32
    %c0_i32_1 = arith.constant 0 : i32
    return %arg0, %c0_i32, %c0_i32_0 : i32, i32, i32
  }
  func.func @transform_1(%arg0: i32) -> (i32, i32) {
    %c0_i32 = arith.constant 0 : i32
    %c0_i32_0 = arith.constant 0 : i32
    %c0_i32_1 = arith.constant 0 : i32
    return %c0_i32, %c0_i32_0 : i32, i32
  }
  func.func @transform_2(%arg0: i32) -> (i32, i32) {
    %c0_i32 = arith.constant 0 : i32
    %c0_i32_0 = arith.constant 0 : i32
    %c0_i32_1 = arith.constant 0 : i32
    return %c0_i32, %c0_i32_0 : i32, i32
  }
  func.func @transform_3(%arg0: i32) -> (i32, i32) {
    %c0_i32 = arith.constant 0 : i32
    %c0_i32_0 = arith.constant 0 : i32
    %c0_i32_1 = arith.constant 0 : i32
    return %c0_i32, %c0_i32_0 : i32, i32
  }
  func.func @transform_4(%arg0: i32) -> (i32, i32) {
    %c0_i32 = arith.constant 0 : i32
    %c0_i32_0 = arith.constant 0 : i32
    %c0_i32_1 = arith.constant 0 : i32
    return %c0_i32, %c0_i32_0 : i32, i32
  }
  func.func @transform_5(%arg0: i32) -> (i32, i32) {
    %c0_i32 = arith.constant 0 : i32
    %c0_i32_0 = arith.constant 0 : i32
    %c0_i32_1 = arith.constant 0 : i32
    return %c0_i32, %c0_i32_0 : i32, i32
  }
  func.func @transform_6(%arg0: i32) -> (i32, i32) {
    %c0_i32 = arith.constant 0 : i32
    %c0_i32_0 = arith.constant 0 : i32
    %c0_i32_1 = arith.constant 0 : i32
    return %c0_i32, %c0_i32_0 : i32, i32
  }
  func.func @transform_7(%arg0: i32) -> (i32, i32, i32) {
    %c0_i32 = arith.constant 0 : i32
    %c0_i32_0 = arith.constant 0 : i32
    %c0_i32_1 = arith.constant 0 : i32
    return %arg0, %c0_i32, %c0_i32_0 : i32, i32, i32
  }
}

</mosaic_0001>

<llo_original>
// kernel: tpu_custom_call.1
$region0: #{tpu_custom_call.1}
  #allocation0 [shape = 'u32[]', space=smem, size = 0x4, offset = 0x4, fixed_abs, tag = 'smem constant byte address 0x4 - core index']
  #allocation1 [shape = 'u32[144,128]{1,0:T(1,128)}', space=vmem, size = 0x12000, scoped, tag = 'internal scratch']
  %s0 = inlined_call_operand.vmem [shape: f32[2,16,128], index: 0, kind: input, shape index: {}]
  %s1 = inlined_call_operand.vmem [shape: bf16[128,64], index: 1, kind: input, shape index: {}]
  %s2 = inlined_call_operand.vmem [shape: f32[1,64], index: 2, kind: input, shape index: {}]
  %s3 = inlined_call_operand.vmem [shape: bf16[256,64], index: 3, kind: input, shape index: {}]
  %s4 = inlined_call_operand.vmem [shape: f32[1,64], index: 4, kind: input, shape index: {}]
  %s5 = inlined_call_operand.vmem [shape: bf16[64,128], index: 5, kind: input, shape index: {}]
  %s6 = inlined_call_operand.vmem [shape: f32[1,128], index: 6, kind: input, shape index: {}]
  %s7 = inlined_call_operand.hbm [shape: f32[2,16,128], index: 7, kind: output, shape index: {}]
  %s8 = sld [smem:[#allocation0]]
  $region61: #{tpu_custom_call.1} parent=0
    _
  %s10 = ssub.s32 1, %s8
  %s11 = scalar_select 0, %s10, %s8
  $region1: #{tpu_custom_call.1} parent=0
    #allocation2 [shape = 'u8[16384]{0}', space=vmem, size = 0x4000, scoped, tag = 'output window, operand 0']
    #allocation3 [shape = 's32[2]{0}', space=sflag, size = 0x8, scoped, tag = 'scoped memory for tpu_custom_call.1']
    %12 = vsyncpa [#allocation3], 0
    %s13 = scalar_lea.sflag [#allocation3], 1
    %14 = vsyncpa %s13, 0
    loop: start=0, step=1, limit=4
    $region2: #{tpu_custom_call.1} parent=1 // loop_pre_header
      _
    $region3: #{tpu_custom_call.1} parent=1 // loop_header
      %s16 = sphi 0, %s20
      %p17 = scmp.ge.s32.totalorder %s16, 4
      %s26 = sphi 0, %s28
      %s29 = sphi 0, %s26
      %s30 = sphi 0, %s29
      %s46 = sphi 0, %s30
      %s50 = sphi 0, %s50
      %s52 = sphi 0, %s50
      %s53 = sphi 0, %s52
      %s67 = sphi 0, %s53
      %s71 = sphi 0, %s71
      %s73 = sphi 0, %s71
      %s74 = sphi 0, %s73
      %s88 = sphi 0, %s74
      %s92 = sphi 0, %s92
      %s94 = sphi 0, %s92
      %s95 = sphi 0, %s94
      %s109 = sphi 0, %s95
      %s113 = sphi 0, %s113
      %s115 = sphi 0, %s113
      %s116 = sphi 0, %s115
      %s130 = sphi 0, %s116
      %s134 = sphi 0, %s134
      %s136 = sphi 0, %s134
      %s137 = sphi 0, %s136
      %s151 = sphi 0, %s137
      %s155 = sphi 0, %s155
      %s157 = sphi 0, %s155
      %s158 = sphi 0, %s157
      %s172 = sphi 0, %s158
      %s178 = sphi 0, %s180
      %s181 = sphi 0, %s178
      %s182 = sphi 0, %s181
      %s198 = sphi 0, %s182
    $region4: #{tpu_custom_call.1} parent=1 // loop_header_branch
      %19 = sbr.rel (%p17) target = $region8
    $region5: #{tpu_custom_call.1} parent=1 // loop_body
      %s21 = ssub.s32 %s16, 1
      %s22 = ssub.s32 %s16, 2
      %s23 = sadd.s32 %s16, 1
      %s24 = ssub.s32 %s16, %s23
      %p25 = scmp.eq.s32.totalorder %s24, 0
      %s27 = sadd.s32 %s26, 1
      %s28 = scalar_select %p25, %s26, %s27
      %p31 = pneg %p25
      %p32 = scmp.eq.s32.totalorder %s16, 1
      %p33 = por %p31, %p32
      %p34 = scmp.ne.s32.totalorder %s26, %s29
      %p35 = scmp.eq.s32.totalorder %s16, 0
      %p36 = por %p34, %p35
      %p37 = scmp.ne.s32.totalorder %s26, %s29
      %p38 = scmp.eq.s32.totalorder %s21, 1
      %p39 = por %p37, %p38
      %p40 = scmp.ne.s32.totalorder %s29, %s30
      %p41 = scmp.eq.s32.totalorder %s21, 0
      %p42 = por %p40, %p41
      %p43 = scmp.ne.s32.totalorder %s29, %s30
      %p44 = scmp.eq.s32.totalorder %s22, 1
      %p45 = por %p43, %p44
      %p47 = scmp.ne.s32.totalorder %s30, %s46
      %p48 = scmp.eq.s32.totalorder %s22, 0
      %p49 = por %p47, %p48
      %s51 = sadd.s32 %s50, 1
      %p54 = scmp.eq.s32.totalorder %s16, 1
      %p55 = scmp.ne.s32.totalorder %s50, %s52
      %p56 = scmp.eq.s32.totalorder %s16, 0
      %p57 = por %p55, %p56
      %p58 = scmp.ne.s32.totalorder %s50, %s52
      %p59 = scmp.eq.s32.totalorder %s21, 1
      %p60 = por %p58, %p59
      %p61 = scmp.ne.s32.totalorder %s52, %s53
      %p62 = scmp.eq.s32.totalorder %s21, 0
      %p63 = por %p61, %p62
      %p64 = scmp.ne.s32.totalorder %s52, %s53
      %p65 = scmp.eq.s32.totalorder %s22, 1
      %p66 = por %p64, %p65
      %p68 = scmp.ne.s32.totalorder %s53, %s67
      %p69 = scmp.eq.s32.totalorder %s22, 0
      %p70 = por %p68, %p69
      %s72 = sadd.s32 %s71, 1
      %p75 = scmp.eq.s32.totalorder %s16, 1
      %p76 = scmp.ne.s32.totalorder %s71, %s73
      %p77 = scmp.eq.s32.totalorder %s16, 0
      %p78 = por %p76, %p77
      %p79 = scmp.ne.s32.totalorder %s71, %s73
      %p80 = scmp.eq.s32.totalorder %s21, 1
      %p81 = por %p79, %p80
      %p82 = scmp.ne.s32.totalorder %s73, %s74
      %p83 = scmp.eq.s32.totalorder %s21, 0
      %p84 = por %p82, %p83
      %p85 = scmp.ne.s32.totalorder %s73, %s74
      %p86 = scmp.eq.s32.totalorder %s22, 1
      %p87 = por %p85, %p86
      %p89 = scmp.ne.s32.totalorder %s74, %s88
      %p90 = scmp.eq.s32.totalorder %s22, 0
      %p91 = por %p89, %p90
      %s93 = sadd.s32 %s92, 1
      %p96 = scmp.eq.s32.totalorder %s16, 1
      %p97 = scmp.ne.s32.totalorder %s92, %s94
      %p98 = scmp.eq.s32.totalorder %s16, 0
      %p99 = por %p97, %p98
      %p100 = scmp.ne.s32.totalorder %s92, %s94
      %p101 = scmp.eq.s32.totalorder %s21, 1
      %p102 = por %p100, %p101
      %p103 = scmp.ne.s32.totalorder %s94, %s95
      %p104 = scmp.eq.s32.totalorder %s21, 0
      %p105 = por %p103, %p104
      %p106 = scmp.ne.s32.totalorder %s94, %s95
      %p107 = scmp.eq.s32.totalorder %s22, 1
      %p108 = por %p106, %p107
      %p110 = scmp.ne.s32.totalorder %s95, %s109
      %p111 = scmp.eq.s32.totalorder %s22, 0
      %p112 = por %p110, %p111
      %s114 = sadd.s32 %s113, 1
      %p117 = scmp.eq.s32.totalorder %s16, 1
      %p118 = scmp.ne.s32.totalorder %s113, %s115
      %p119 = scmp.eq.s32.totalorder %s16, 0
      %p120 = por %p118, %p119
      %p121 = scmp.ne.s32.totalorder %s113, %s115
      %p122 = scmp.eq.s32.totalorder %s21, 1
      %p123 = por %p121, %p122
      %p124 = scmp.ne.s32.totalorder %s115, %s116
      %p125 = scmp.eq.s32.totalorder %s21, 0
      %p126 = por %p124, %p125
      %p127 = scmp.ne.s32.totalorder %s115, %s116
      %p128 = scmp.eq.s32.totalorder %s22, 1
      %p129 = por %p127, %p128
      %p131 = scmp.ne.s32.totalorder %s116, %s130
      %p132 = scmp.eq.s32.totalorder %s22, 0
      %p133 = por %p131, %p132
      %s135 = sadd.s32 %s134, 1
      %p138 = scmp.eq.s32.totalorder %s16, 1
      %p139 = scmp.ne.s32.totalorder %s134, %s136
      %p140 = scmp.eq.s32.totalorder %s16, 0
      %p141 = por %p139, %p140
      %p142 = scmp.ne.s32.totalorder %s134, %s136
      %p143 = scmp.eq.s32.totalorder %s21, 1
      %p144 = por %p142, %p143
      %p145 = scmp.ne.s32.totalorder %s136, %s137
      %p146 = scmp.eq.s32.totalorder %s21, 0
      %p147 = por %p145, %p146
      %p148 = scmp.ne.s32.totalorder %s136, %s137
      %p149 = scmp.eq.s32.totalorder %s22, 1
      %p150 = por %p148, %p149
      %p152 = scmp.ne.s32.totalorder %s137, %s151
      %p153 = scmp.eq.s32.totalorder %s22, 0
      %p154 = por %p152, %p153
      %s156 = sadd.s32 %s155, 1
      %p159 = scmp.eq.s32.totalorder %s16, 1
      %p160 = scmp.ne.s32.totalorder %s155, %s157
      %p161 = scmp.eq.s32.totalorder %s16, 0
      %p162 = por %p160, %p161
      %p163 = scmp.ne.s32.totalorder %s155, %s157
      %p164 = scmp.eq.s32.totalorder %s21, 1
      %p165 = por %p163, %p164
      %p166 = scmp.ne.s32.totalorder %s157, %s158
      %p167 = scmp.eq.s32.totalorder %s21, 0
      %p168 = por %p166, %p167
      %p169 = scmp.ne.s32.totalorder %s157, %s158
      %p170 = scmp.eq.s32.totalorder %s22, 1
      %p171 = por %p169, %p170
      %p173 = scmp.ne.s32.totalorder %s158, %s172
      %p174 = scmp.eq.s32.totalorder %s22, 0
      %p175 = por %p173, %p174
      %s176 = ssub.s32 %s16, %s23
      %p177 = scmp.eq.s32.totalorder %s176, 0
      %s179 = sadd.s32 %s178, 1
      %s180 = scalar_select %p177, %s178, %s179
      %p183 = pneg %p177
      %p184 = scmp.eq.s32.totalorder %s16, 1
      %p185 = por %p183, %p184
      %p186 = scmp.ne.s32.totalorder %s178, %s181
      %p187 = scmp.eq.s32.totalorder %s16, 0
      %p188 = por %p186, %p187
      %p189 = scmp.ne.s32.totalorder %s178, %s181
      %p190 = scmp.eq.s32.totalorder %s21, 1
      %p191 = por %p189, %p190
      %p192 = scmp.ne.s32.totalorder %s181, %s182
      %p193 = scmp.eq.s32.totalorder %s21, 0
      %p194 = por %p192, %p193
      %p195 = scmp.ne.s32.totalorder %s181, %s182
      %p196 = scmp.eq.s32.totalorder %s22, 1
      %p197 = por %p195, %p196
      %p199 = scmp.ne.s32.totalorder %s182, %s198
      %p200 = scmp.eq.s32.totalorder %s22, 0
      %p201 = por %p199, %p200
      %p202 = scmp.le.s32.totalorder 1, %s16
      %p203 = scmp.lt.s32.totalorder %s16, 3
      %p204 = pnand %p202, %p203
      %p205 = pneg %p204
      // Predicated region
      $region9: #{tpu_custom_call.1} parent=5 // pred_check
        _
      $region10: #{tpu_custom_call.1} parent=5 // pred_check_branch
        %207 = sbr.rel (%p204) target = $region12
      $region11: #{tpu_custom_call.1} parent=5 // pred_region
        %s208 = ssub.s32 %s16, 1
        // Predicated region
        $region13: #{tpu_custom_call.1} parent=11 // pred_check
          %p209 = pneg %p63
        $region14: #{tpu_custom_call.1} parent=11 // pred_check_branch
          %211 = sbr.rel (%p209) target = $region16
        $region15: #{tpu_custom_call.1} parent=11 // pred_region
          _
        $region16: #{tpu_custom_call.1} parent=11 // pred_fallthru
          _
        // Predicated region
        $region17: #{tpu_custom_call.1} parent=11 // pred_check
          %p212 = pneg %p84
        $region18: #{tpu_custom_call.1} parent=11 // pred_check_branch
          %214 = sbr.rel (%p212) target = $region20
        $region19: #{tpu_custom_call.1} parent=11 // pred_region
          _
        $region20: #{tpu_custom_call.1} parent=11 // pred_fallthru
          _
        // Predicated region
        $region21: #{tpu_custom_call.1} parent=11 // pred_check
          %p215 = pneg %p105
        $region22: #{tpu_custom_call.1} parent=11 // pred_check_branch
          %217 = sbr.rel (%p215) target = $region24
        $region23: #{tpu_custom_call.1} parent=11 // pred_region
          _
        $region24: #{tpu_custom_call.1} parent=11 // pred_fallthru
          _
        // Predicated region
        $region25: #{tpu_custom_call.1} parent=11 // pred_check
          %p218 = pneg %p126
        $region26: #{tpu_custom_call.1} parent=11 // pred_check_branch
          %220 = sbr.rel (%p218) target = $region28
        $region27: #{tpu_custom_call.1} parent=11 // pred_region
          _
        $region28: #{tpu_custom_call.1} parent=11 // pred_fallthru
          _
        // Predicated region
        $region29: #{tpu_custom_call.1} parent=11 // pred_check
          %p221 = pneg %p147
        $region30: #{tpu_custom_call.1} parent=11 // pred_check_branch
          %223 = sbr.rel (%p221) target = $region32
        $region31: #{tpu_custom_call.1} parent=11 // pred_region
          _
        $region32: #{tpu_custom_call.1} parent=11 // pred_fallthru
          _
        // Predicated region
        $region33: #{tpu_custom_call.1} parent=11 // pred_check
          %p224 = pneg %p168
        $region34: #{tpu_custom_call.1} parent=11 // pred_check_branch
          %226 = sbr.rel (%p224) target = $region36
        $region35: #{tpu_custom_call.1} parent=11 // pred_region
          _
        $region36: #{tpu_custom_call.1} parent=11 // pred_fallthru
          _
      $region12: #{tpu_custom_call.1} parent=5 // pred_fallthru
        _
      %p227 = scmp.lt.s32.totalorder %s16, 2
      // Predicated region
      $region37: #{tpu_custom_call.1} parent=5 // pred_check
        %p228 = pneg %p227
      $region38: #{tpu_custom_call.1} parent=5 // pred_check_branch
        %230 = sbr.rel (%p228) target = $region40
      $region39: #{tpu_custom_call.1} parent=5 // pred_region
        // Predicated region
        $region41: #{tpu_custom_call.1} parent=39 // pred_check
          %p231 = pneg %p36
        $region42: #{tpu_custom_call.1} parent=39 // pred_check_branch
          %233 = sbr.rel (%p231) target = $region44
        $region43: #{tpu_custom_call.1} parent=39 // pred_region
          %p234 = scmp.lt.s32.totalorder %s16, 1
          %s235 = scalar_select %p234, %s16, 1
          %s236 = smul.addr %s235, 2
          %s237 = smul.addr %s236, 8
          %s238 = scalar_lea.vmem %s0, %s237
        $region44: #{tpu_custom_call.1} parent=39 // pred_fallthru
          _
      $region40: #{tpu_custom_call.1} parent=5 // pred_fallthru
        _
      %p239 = scmp.le.s32.totalorder 1, %s16
      %p240 = scmp.lt.s32.totalorder %s16, 3
      %p241 = pnand %p239, %p240
      %p242 = pneg %p241
      // Predicated region
      $region45: #{tpu_custom_call.1} parent=5 // pred_check
        _
      $region46: #{tpu_custom_call.1} parent=5 // pred_check_branch
        %244 = sbr.rel (%p241) target = $region48
      $region47: #{tpu_custom_call.1} parent=5 // pred_region
        %s245 = ssub.s32 %s16, 1
        %p246 = scmp.lt.s32.totalorder %s21, 1
        %s247 = scalar_select %p246, %s21, 1
        %s248 = smul.addr %s247, 2
        %s249 = smul.addr %s248, 8
        %s250 = scalar_lea.vmem %s0, %s249
        %p251 = pneg %p42
        %p252 = pneg %p39
        %p253 = pneg %p63
        %p254 = pneg %p60
        %p255 = pneg %p84
        %p256 = pneg %p81
        %p257 = pneg %p105
        %p258 = pneg %p102
        %p259 = pneg %p126
        %p260 = pneg %p123
        %p261 = pneg %p147
        %p262 = pneg %p144
        %p263 = pneg %p168
        %p264 = pneg %p165
        %p265 = pneg %p194
        %p266 = pneg %p191
        %s267 = sand.u32 %s181, 1
        %s268 = scalar_lea.sflag [#allocation3], %s267
        %s269 = sand.u32 %s181, 1
        %s270 = smul.addr %s269, 16
        %s271 = scalar_lea.vmem [#allocation2], %s270
        %p272 = scmp.lt.s32.totalorder %s21, 1
        %s273 = scalar_select %p272, %s21, 1
        %s274 = smul.addr %s273, 2
        %s275 = smul.addr %s274, 8
        %s276 = scalar_lea.vmem %s0, %s275
        %v278 = vld [vmem:[%s276] sm:$0xff]
        %v279 = vld [vmem:[%s276 + $0x8] sm:$0xff]
        %v280 = vmax.f32 %v278, 0.0
        %v281 = vmax.f32 %v279, 0.0
        %v282 = vpack.c.bf16 %v281, %v280
        %v283 = vld [vmem:[%s1] sm:$0xf]
        %v284 = vld [vmem:[%s1 + $0x4] sm:$0xf]
        %v285 = vld [vmem:[%s1 + $0x8] sm:$0xf]
        %v286 = vld [vmem:[%s1 + $0xc] sm:$0xf]
        %v287 = vld [vmem:[%s1 + $0x10] sm:$0xf]
        %v288 = vld [vmem:[%s1 + $0x14] sm:$0xf]
        %v289 = vld [vmem:[%s1 + $0x18] sm:$0xf]
        %v290 = vld [vmem:[%s1 + $0x1c] sm:$0xf]
        %v291 = vld [vmem:[%s1 + $0x20] sm:$0xf]
        %v292 = vld [vmem:[%s1 + $0x24] sm:$0xf]
        %v293 = vld [vmem:[%s1 + $0x28] sm:$0xf]
        %v294 = vld [vmem:[%s1 + $0x2c] sm:$0xf]
        %v295 = vld [vmem:[%s1 + $0x30] sm:$0xf]
        %v296 = vld [vmem:[%s1 + $0x34] sm:$0xf]
        %v297 = vld [vmem:[%s1 + $0x38] sm:$0xf]
        %v298 = vld [vmem:[%s1 + $0x3c] sm:$0xf]
        %v299 = vld [vmem:[%s2] sm:$0x1]
        %v301 = vlaneseq
        %v302 = vshrl.u32 %v301, 7
        %v303 = vsub.s32 0, %v302
        %v304 = vrot.slane %v299, %v303
        %v322 = vunpack.c.l.b16 %v283
        %v323 = vunpack.c.l.b16 %v284
        %v324 = vunpack.c.l.b16 %v285
        %v325 = vunpack.c.l.b16 %v286
        %v326 = vunpack.c.l.b16 %v287
        %v327 = vunpack.c.l.b16 %v288
        %v328 = vunpack.c.l.b16 %v289
        %v329 = vunpack.c.l.b16 %v290
        %v330 = vunpack.c.l.b16 %v291
        %v331 = vunpack.c.l.b16 %v292
        %v332 = vunpack.c.l.b16 %v293
        %v333 = vunpack.c.l.b16 %v294
        %v334 = vunpack.c.l.b16 %v295
        %v335 = vunpack.c.l.b16 %v296
        %v336 = vunpack.c.l.b16 %v297
        %v337 = vunpack.c.l.b16 %v298
        %v338 = vpack.c.b16 %v323, %v322
        %v339 = vpack.c.b16 %v325, %v324
        %v340 = vpack.c.b16 %v327, %v326
        %v341 = vpack.c.b16 %v329, %v328
        %v342 = vpack.c.b16 %v331, %v330
        %v343 = vpack.c.b16 %v333, %v332
        %v344 = vpack.c.b16 %v335, %v334
        %v345 = vpack.c.b16 %v337, %v336
        %354 = vmatprep.subr.bf16.mxu0 0
        %355 = vmatpush1.bf16.msra.mxu0 %v345
        %356 = vmatprep.subr.bf16.mxu0 0
        %357 = vmatpush1.bf16.msra.mxu0 %v344
        %358 = vmatprep.subr.bf16.mxu0 0
        %359 = vmatpush1.bf16.msra.mxu0 %v343
        %360 = vmatprep.subr.bf16.mxu0 0
        %361 = vmatpush1.bf16.msra.mxu0 %v342
        %362 = vmatprep.subr.bf16.mxu0 0
        %363 = vmatpush1.bf16.msra.mxu0 %v341
        %364 = vmatprep.subr.bf16.mxu0 0
        %365 = vmatpush1.bf16.msra.mxu0 %v340
        %366 = vmatprep.subr.bf16.mxu0 0
        %367 = vmatpush1.bf16.msra.mxu0 %v339
        %368 = vmatprep.subr.bf16.mxu0 0
        %369 = vmatpush1.bf16.msra.mxu0 %v338
        %370 = vmatprep.subr.bf16.mxu0 0
        %371 = vmatpush2.bf16.msra.mxu0 0
        %372 = vmatprep.subr.bf16.mxu0 0
        %373 = vmatpush2.bf16.msra.mxu0 0
        %374 = vmatprep.subr.bf16.mxu0 0
        %375 = vmatpush2.bf16.msra.mxu0 0
        %376 = vmatprep.subr.bf16.mxu0 0
        %377 = vmatpush2.bf16.msra.mxu0 0
        %378 = vmatprep.subr.bf16.mxu0 0
        %379 = vmatpush2.bf16.msra.mxu0 0
        %380 = vmatprep.subr.bf16.mxu0 0
        %381 = vmatpush2.bf16.msra.mxu0 0
        %382 = vmatprep.subr.bf16.mxu0 0
        %383 = vmatpush2.bf16.msra.mxu0 0
        %384 = vmatprep.subr.bf16.mxu0 0
        %385 = vmatpush2.bf16.msra.mxu0 0
        %386 = vmatprep.mubr.bf16.mxu0 0
        %387 = vmatmul.mubr.bf16.gmra.mxu0 %v282
        %v388 = vpop.f32.mrf.mxu0
        %v389 = vadd.f32 %v304, %v388
        %v390 = vpop.f32.mrf.mxu0
        %v391 = vpop.f32.mrf.mxu0
        %v392 = vadd.f32 %v304, %v391
        %v393 = vpop.f32.mrf.mxu0
        %394 = vdwg.mxu0
        %v395 = vmax.f32 %v389, 0.0
        %v396 = vmax.f32 %v392, 0.0
        %vm399 = vcmask 1042432
        %v400 = vrot.slane %v395, 5
        %v401 = vrot.slane %v396, 5
        %v402 = vsel %vm399, %v400, %v401
        %v405 = vsel %vm399, 0.0, %v400
        %vm407 = vcmask 1046528
        %v408 = vrot.slane %v405, 1
        %v409 = vrot.slane %v402, 1
        %v410 = vsel %vm407, %v408, %v409
        %v411 = vrot.slane %v401, 1
        %v412 = vsel %vm407, %v409, %v411
        %413 = vrot.lane.b32.xlu0 %v410, 64
        %v414 = vpop.permute.xlu0 %413
        %415 = vrot.lane.b32.xlu0 %v412, 64
        %v416 = vpop.permute.xlu0 %415
        %vm419 = vcmask 1045504
        %v420 = vrot.slane %v405, 2
        %v421 = vrot.slane %v402, 2
        %v422 = vsel %vm419, %v420, %v421
        %v423 = vrot.slane %v401, 2
        %v424 = vsel %vm419, %v421, %v423
        %vm427 = vcmask 1044480
        %v428 = vrot.slane %v405, 3
        %v429 = vrot.slane %v402, 3
        %v430 = vsel %vm427, %v428, %v429
        %v431 = vrot.slane %v401, 3
        %v432 = vsel %vm427, %v429, %v431
        %433 = vrot.lane.b32.xlu0 %v430, 64
        %v434 = vpop.permute.xlu0 %433
        %435 = vrot.lane.b32.xlu0 %v432, 64
        %v436 = vpop.permute.xlu0 %435
        %vm439 = vcmask 523264
        %v440 = vsel %vm439, %v405, %v414
        %v441 = vsel %vm439, %v402, %v416
        %v442 = vsel %vm439, %v422, %v434
        %v443 = vsel %vm439, %v424, %v436
        %v444 = vpack.c.bf16 %v441, %v440
        %v445 = vpack.c.bf16 %v443, %v442
        %v446 = vld [vmem:[%s3] sm:$0xf]
        %v447 = vld [vmem:[%s3 + $0x4] sm:$0xf]
        %v448 = vld [vmem:[%s3 + $0x8] sm:$0xf]
        %v449 = vld [vmem:[%s3 + $0xc] sm:$0xf]
        %v450 = vld [vmem:[%s3 + $0x10] sm:$0xf]
        %v451 = vld [vmem:[%s3 + $0x14] sm:$0xf]
        %v452 = vld [vmem:[%s3 + $0x18] sm:$0xf]
        %v453 = vld [vmem:[%s3 + $0x1c] sm:$0xf]
        %v454 = vld [vmem:[%s3 + $0x20] sm:$0xf]
        %v455 = vld [vmem:[%s3 + $0x24] sm:$0xf]
        %v456 = vld [vmem:[%s3 + $0x28] sm:$0xf]
        %v457 = vld [vmem:[%s3 + $0x2c] sm:$0xf]
        %v458 = vld [vmem:[%s3 + $0x30] sm:$0xf]
        %v459 = vld [vmem:[%s3 + $0x34] sm:$0xf]
        %v460 = vld [vmem:[%s3 + $0x38] sm:$0xf]
        %v461 = vld [vmem:[%s3 + $0x3c] sm:$0xf]
        %v462 = vld [vmem:[%s3 + $0x40] sm:$0xf]
        %v463 = vld [vmem:[%s3 + $0x44] sm:$0xf]
        %v464 = vld [vmem:[%s3 + $0x48] sm:$0xf]
        %v465 = vld [vmem:[%s3 + $0x4c] sm:$0xf]
        %v466 = vld [vmem:[%s3 + $0x50] sm:$0xf]
        %v467 = vld [vmem:[%s3 + $0x54] sm:$0xf]
        %v468 = vld [vmem:[%s3 + $0x58] sm:$0xf]
        %v469 = vld [vmem:[%s3 + $0x5c] sm:$0xf]
        %v470 = vld [vmem:[%s3 + $0x60] sm:$0xf]
        %v471 = vld [vmem:[%s3 + $0x64] sm:$0xf]
        %v472 = vld [vmem:[%s3 + $0x68] sm:$0xf]
        %v473 = vld [vmem:[%s3 + $0x6c] sm:$0xf]
        %v474 = vld [vmem:[%s3 + $0x70] sm:$0xf]
        %v475 = vld [vmem:[%s3 + $0x74] sm:$0xf]
        %v476 = vld [vmem:[%s3 + $0x78] sm:$0xf]
        %v477 = vld [vmem:[%s3 + $0x7c] sm:$0xf]
        %v478 = vld [vmem:[%s4] sm:$0x1]
        %v480 = vlaneseq
        %v481 = vshrl.u32 %v480, 7
        %v482 = vsub.s32 0, %v481
        %v483 = vrot.slane %v478, %v482
        %v517 = vunpack.c.l.b16 %v446
        %v518 = vunpack.c.l.b16 %v447
        %v519 = vunpack.c.l.b16 %v448
        %v520 = vunpack.c.l.b16 %v449
        %v521 = vunpack.c.l.b16 %v450
        %v522 = vunpack.c.l.b16 %v451
        %v523 = vunpack.c.l.b16 %v452
        %v524 = vunpack.c.l.b16 %v453
        %v525 = vunpack.c.l.b16 %v454
        %v526 = vunpack.c.l.b16 %v455
        %v527 = vunpack.c.l.b16 %v456
        %v528 = vunpack.c.l.b16 %v457
        %v529 = vunpack.c.l.b16 %v458
        %v530 = vunpack.c.l.b16 %v459
        %v531 = vunpack.c.l.b16 %v460
        %v532 = vunpack.c.l.b16 %v461
        %v533 = vunpack.c.l.b16 %v462
        %v534 = vunpack.c.l.b16 %v463
        %v535 = vunpack.c.l.b16 %v464
        %v536 = vunpack.c.l.b16 %v465
        %v537 = vunpack.c.l.b16 %v466
        %v538 = vunpack.c.l.b16 %v467
        %v539 = vunpack.c.l.b16 %v468
        %v540 = vunpack.c.l.b16 %v469
        %v541 = vunpack.c.l.b16 %v470
        %v542 = vunpack.c.l.b16 %v471
        %v543 = vunpack.c.l.b16 %v472
        %v544 = vunpack.c.l.b16 %v473
        %v545 = vunpack.c.l.b16 %v474
        %v546 = vunpack.c.l.b16 %v475
        %v547 = vunpack.c.l.b16 %v476
        %v548 = vunpack.c.l.b16 %v477
        %v549 = vpack.c.b16 %v518, %v517
        %v550 = vpack.c.b16 %v520, %v519
        %v551 = vpack.c.b16 %v522, %v521
        %v552 = vpack.c.b16 %v524, %v523
        %v553 = vpack.c.b16 %v526, %v525
        %v554 = vpack.c.b16 %v528, %v527
        %v555 = vpack.c.b16 %v530, %v529
        %v556 = vpack.c.b16 %v532, %v531
        %v557 = vpack.c.b16 %v534, %v533
        %v558 = vpack.c.b16 %v536, %v535
        %v559 = vpack.c.b16 %v538, %v537
        %v560 = vpack.c.b16 %v540, %v539
        %v561 = vpack.c.b16 %v542, %v541
        %v562 = vpack.c.b16 %v544, %v543
        %v563 = vpack.c.b16 %v546, %v545
        %v564 = vpack.c.b16 %v548, %v547
        %581 = vmatprep.subr.bf16.mxu0 0
        %582 = vmatpush1.bf16.msra.mxu0 %v556
        %583 = vmatprep.subr.bf16.mxu0 0
        %584 = vmatpush1.bf16.msra.mxu0 %v555
        %585 = vmatprep.subr.bf16.mxu0 0
        %586 = vmatpush1.bf16.msra.mxu0 %v554
        %587 = vmatprep.subr.bf16.mxu0 0
        %588 = vmatpush1.bf16.msra.mxu0 %v553
        %589 = vmatprep.subr.bf16.mxu0 0
        %590 = vmatpush1.bf16.msra.mxu0 %v552
        %591 = vmatprep.subr.bf16.mxu0 0
        %592 = vmatpush1.bf16.msra.mxu0 %v551
        %593 = vmatprep.subr.bf16.mxu0 0
        %594 = vmatpush1.bf16.msra.mxu0 %v550
        %595 = vmatprep.subr.bf16.mxu0 0
        %596 = vmatpush1.bf16.msra.mxu0 %v549
        %597 = vmatprep.subr.bf16.mxu0 0
        %598 = vmatpush2.bf16.msra.mxu0 %v564
        %599 = vmatprep.subr.bf16.mxu0 0
        %600 = vmatpush2.bf16.msra.mxu0 %v563
        %601 = vmatprep.subr.bf16.mxu0 0
        %602 = vmatpush2.bf16.msra.mxu0 %v562
        %603 = vmatprep.subr.bf16.mxu0 0
        %604 = vmatpush2.bf16.msra.mxu0 %v561
        %605 = vmatprep.subr.bf16.mxu0 0
        %606 = vmatpush2.bf16.msra.mxu0 %v560
        %607 = vmatprep.subr.bf16.mxu0 0
        %608 = vmatpush2.bf16.msra.mxu0 %v559
        %609 = vmatprep.subr.bf16.mxu0 0
        %610 = vmatpush2.bf16.msra.mxu0 %v558
        %611 = vmatprep.subr.bf16.mxu0 0
        %612 = vmatpush2.bf16.msra.mxu0 %v557
        %613 = vmatprep.mubr.bf16.mxu0 %v445
        %614 = vmatmul.mubr.bf16.gmra.mxu0 %v444
        %v615 = vpop.f32.mrf.mxu0
        %v616 = vadd.f32 %v483, %v615
        %v617 = vpop.f32.mrf.mxu0
        %v618 = vpop.f32.mrf.mxu0
        %v619 = vadd.f32 %v483, %v618
        %v620 = vpop.f32.mrf.mxu0
        %621 = vdwg.mxu0
        %v622 = vmax.f32 %v616, 0.0
        %v623 = vmax.f32 %v619, 0.0
        %v624 = vpack.c.bf16 %v623, %v622
        %v625 = vld [vmem:[%s5] sm:$0xf]
        %v626 = vld [vmem:[%s5 + $0x4] sm:$0xf]
        %v627 = vld [vmem:[%s5 + $0x8] sm:$0xf]
        %v628 = vld [vmem:[%s5 + $0xc] sm:$0xf]
        %v629 = vld [vmem:[%s5 + $0x10] sm:$0xf]
        %v630 = vld [vmem:[%s5 + $0x14] sm:$0xf]
        %v631 = vld [vmem:[%s5 + $0x18] sm:$0xf]
        %v632 = vld [vmem:[%s5 + $0x1c] sm:$0xf]
        %v633 = vld [vmem:[%s6] sm:$0x1]
        %v635 = vlaneseq
        %v636 = vshrl.u32 %v635, 7
        %v637 = vsub.s32 0, %v636
        %v638 = vrot.slane %v633, %v637
        %v648 = vunpack.c.l.b16 %v625
        %v649 = vunpack.c.l.b16 %v626
        %v650 = vunpack.c.l.b16 %v627
        %v651 = vunpack.c.l.b16 %v628
        %v652 = vunpack.c.l.b16 %v629
        %v653 = vunpack.c.l.b16 %v630
        %v654 = vunpack.c.l.b16 %v631
        %v655 = vunpack.c.l.b16 %v632
        %v656 = vpack.c.b16 %v649, %v648
        %v657 = vpack.c.b16 %v651, %v650
        %v658 = vpack.c.b16 %v653, %v652
        %v659 = vpack.c.b16 %v655, %v654
        %v665 = vsel %vm439, %v624, 0
        %667 = vmatprep.subr.bf16.mxu0 0
        %668 = vmatpush1.bf16.msra.mxu0 0
        %669 = vmatprep.subr.bf16.mxu0 0
        %670 = vmatpush1.bf16.msra.mxu0 0
        %671 = vmatprep.subr.bf16.mxu0 0
        %672 = vmatpush1.bf16.msra.mxu0 0
        %673 = vmatprep.subr.bf16.mxu0 0
        %674 = vmatpush1.bf16.msra.mxu0 0
        %675 = vmatprep.subr.bf16.mxu0 0
        %676 = vmatpush1.bf16.msra.mxu0 %v659
        %677 = vmatprep.subr.bf16.mxu0 0
        %678 = vmatpush1.bf16.msra.mxu0 %v658
        %679 = vmatprep.subr.bf16.mxu0 0
        %680 = vmatpush1.bf16.msra.mxu0 %v657
        %681 = vmatprep.subr.bf16.mxu0 0
        %682 = vmatpush1.bf16.msra.mxu0 %v656
        %683 = vmatprep.subr.bf16.mxu0 0
        %684 = vmatpush2.bf16.msra.mxu0 0
        %685 = vmatprep.subr.bf16.mxu0 0
        %686 = vmatpush2.bf16.msra.mxu0 0
        %687 = vmatprep.subr.bf16.mxu0 0
        %688 = vmatpush2.bf16.msra.mxu0 0
        %689 = vmatprep.subr.bf16.mxu0 0
        %690 = vmatpush2.bf16.msra.mxu0 0
        %691 = vmatprep.subr.bf16.mxu0 0
        %692 = vmatpush2.bf16.msra.mxu0 0
        %693 = vmatprep.subr.bf16.mxu0 0
        %694 = vmatpush2.bf16.msra.mxu0 0
        %695 = vmatprep.subr.bf16.mxu0 0
        %696 = vmatpush2.bf16.msra.mxu0 0
        %697 = vmatprep.subr.bf16.mxu0 0
        %698 = vmatpush2.bf16.msra.mxu0 0
        %699 = vmatprep.mubr.bf16.mxu0 0
        %700 = vmatmul.mubr.bf16.gmra.mxu0 %v665
        %v701 = vpop.f32.mrf.mxu0
        %v702 = vadd.f32 %v638, %v701
        %v703 = vpop.f32.mrf.mxu0
        %v704 = vpop.f32.mrf.mxu0
        %v705 = vadd.f32 %v638, %v704
        %v706 = vpop.f32.mrf.mxu0
        %707 = vdwg.mxu0
        %v708 = vadd.f32 %v702, %v278
        %v709 = vadd.f32 %v705, %v279
        %710 = vst [vmem:[%s271] sm:$0xff] %v708
        %711 = vst [vmem:[%s271 + $0x8] sm:$0xff] %v709
        %s712 = sand.u32 %s181, 1
        %s713 = scalar_lea.sflag [#allocation3], %s712
        %s714 = sand.u32 %s181, 1
        %s715 = smul.addr %s714, 16
        %s716 = scalar_lea.vmem [#allocation2], %s715
        // Predicated region
        $region49: #{tpu_custom_call.1} parent=47 // pred_check
          %p717 = pneg %p191
        $region50: #{tpu_custom_call.1} parent=47 // pred_check_branch
          %719 = sbr.rel (%p717) target = $region52
        $region51: #{tpu_custom_call.1} parent=47 // pred_region
          %s721 = ssub.s32 256, 256
          %722 = vsyncadd %s713, %s721
          %s723 = smul.addr %s21, 2
          %s724 = smul.addr %s723, 128
          %s725 = scalar_lea.hbm %s7, %s724
          %s726 = sshll.u32 %s716, 4
          %s727 = int_to_ptr.vmem [resolvable:$true] %s726
          %732 = dma.vmem_to_hbm [thread:$0]  %s727, 256, %s725, %s713, 128, 128, 8
        $region52: #{tpu_custom_call.1} parent=47 // pred_fallthru
          _
      $region48: #{tpu_custom_call.1} parent=5 // pred_fallthru
        _
      %p733 = scmp.le.s32.totalorder 2, %s16
      // Predicated region
      $region53: #{tpu_custom_call.1} parent=5 // pred_check
        %p734 = pneg %p733
      $region54: #{tpu_custom_call.1} parent=5 // pred_check_branch
        %736 = sbr.rel (%p734) target = $region56
      $region55: #{tpu_custom_call.1} parent=5 // pred_region
        %s737 = ssub.s32 %s16, 2
        // Predicated region
        $region57: #{tpu_custom_call.1} parent=55 // pred_check
          %p738 = pneg %p197
        $region58: #{tpu_custom_call.1} parent=55 // pred_check_branch
          %740 = sbr.rel (%p738) target = $region60
        $region59: #{tpu_custom_call.1} parent=55 // pred_region
          %s741 = sand.u32 %s182, 1
          %s742 = scalar_lea.sflag [#allocation3], %s741
          %s743 = sand.u32 %s182, 1
          %s744 = smul.addr %s743, 16
          %s745 = scalar_lea.vmem [#allocation2], %s744
          %746 = dma.done %s742, 256
        $region60: #{tpu_custom_call.1} parent=55 // pred_fallthru
          _
      $region56: #{tpu_custom_call.1} parent=5 // pred_fallthru
        _
    $region6: #{tpu_custom_call.1} parent=1 // loop_footer
      %s20 = sadd.s32 1, %s16
    $region7: #{tpu_custom_call.1} parent=1 // loop_footer_branch
      %15 = sbr.rel target = $region3
    $region8: #{tpu_custom_call.1} parent=1 // loop_exit
      _
    %747 = vsyncpa [#allocation3], 1
    %s748 = scalar_lea.sflag [#allocation3], 1
    %749 = vsyncpa %s748, 1

</llo_original>
